<compile_context>
chip_gen: v7x
topology: tpu7x:2x2x1
jax: 0.10.0
libtpu: 0.0.40
codegen_flags: <defaults>
</compile_context>

<pallas_src>
import functools

import jax
import jax.numpy as jnp
from jax.experimental import pallas as pl
from jax.experimental.pallas import tpu as pltpu

_LANE = 128
_SUBLANE = 8


def _round_up(n, m):
    return (n + m - 1) // m * m


def _lstm_kernel(x_ref, h_ref, c_ref, wx_ref, wh_ref, b_ref, out_ref, *, opad, hpad):
    """Single fused LSTM-cell step (one batch tile).

    x_ref:[bm,I]  h_ref:[bm,H]  c_ref:[bm,Hpad]  (f32)
    wx_ref:[I,Opad+Hpad]  wh_ref:[H,Opad+Hpad]   (bf16, fused cols = [i2o | i2h])
    b_ref:[1,Opad+Hpad] (f32)
    out_ref:[bm, Opad+2*Hpad] slab = [ g_o | hidden_new | cell_new ] (f32)
    """
    # bf16 MXU matmuls, f32 accumulation; split contraction replaces the concat.
    x_mm = x_ref[...].astype(wx_ref.dtype)
    h_mm = h_ref[...].astype(wh_ref.dtype)
    g = (jnp.dot(x_mm, wx_ref[...], preferred_element_type=jnp.float32)
         + jnp.dot(h_mm, wh_ref[...], preferred_element_type=jnp.float32)
         + b_ref[...])                                   # [bm, Opad+Hpad] f32

    # Lane-aligned split of the fused result (opad, hpad are multiples of 128).
    g_o = g[:, :opad]                                    # i2o pre-activation
    g_h = g[:, opad:]                                    # i2h pre-activation

    # All gate / state math in f32 (required on v5e, free elsewhere).
    ig = jax.nn.sigmoid(g_o)            # input_gate == output_gate in this module
    cell_new = ig * jnp.tanh(c_ref[...]) + (1.0 - ig) * jnp.tanh(g_h)
    hidden_new = ig * jnp.tanh(cell_new)

    # Lane-dense, 128-aligned unmasked stores into a single output slab.
    out_ref[:, :opad] = g_o
    out_ref[:, opad:opad + hpad] = hidden_new
    out_ref[:, opad + hpad:] = cell_new


def prepare_params(w_i2h, b_i2h, w_i2o, b_i2o, input_size,
                   matmul_dtype=jnp.bfloat16):
    """One-time weight prep: fuse i2h/i2o, transpose to [in, out], pad to 128 lanes.

    w_i2h:[H, I+H], b_i2h:[H], w_i2o:[O, I+H], b_i2o:[O]   (PyTorch layout)
    """
    H, K = w_i2h.shape
    O = w_i2o.shape[0]
    I = input_size
    assert K == I + H, "weight shape inconsistent with input_size"
    assert O == H, "module broadcasting requires output_size == hidden_size"

    opad = _round_up(O, _LANE)
    hpad = _round_up(H, _LANE)

    def pad_cols(w_t, n_pad):            # w_t: [in, n] -> [in, n_pad]
        return jnp.pad(w_t, ((0, 0), (0, n_pad - w_t.shape[1])))

    # Split the contraction (x vs hidden) and fuse the outputs ([i2o | i2h]).
    wx = jnp.concatenate([pad_cols(w_i2o[:, :I].T, opad),
                          pad_cols(w_i2h[:, :I].T, hpad)], axis=1)    # [I, opad+hpad]
    wh = jnp.concatenate([pad_cols(w_i2o[:, I:].T, opad),
                          pad_cols(w_i2h[:, I:].T, hpad)], axis=1)    # [H, opad+hpad]
    b = jnp.concatenate([jnp.pad(b_i2o, (0, opad - O)),
                         jnp.pad(b_i2h, (0, hpad - H))]).reshape(1, opad + hpad)

    return {
        "wx": wx.astype(matmul_dtype),
        "wh": wh.astype(matmul_dtype),
        "b": b.astype(jnp.float32),
        "sizes": (I, H, O, opad, hpad),
    }


def lstm_forward(x, hidden, cell, params, *, batch_tile=256):
    """x:[B,I]  hidden:[B,H]  cell:[B,H] -> (output[B,O], hidden_new[B,H], cell_new[B,H])."""
    I, H, O, opad, hpad = params["sizes"]
    B = x.shape[0]

    # Sublane-align the batch; tile it for large B (weights stay resident).
    b_pad = _round_up(B, _SUBLANE)
    bm = min(batch_tile, b_pad)
    if b_pad != B:
        row_pad = ((0, b_pad - B), (0, 0))
        x = jnp.pad(x, row_pad)
        hidden = jnp.pad(hidden, row_pad)
        cell = jnp.pad(cell, row_pad)
    c_pad = cell if hpad == H else jnp.pad(cell, ((0, 0), (0, hpad - H)))

    w_cols = opad + hpad
    out_cols = opad + 2 * hpad
    kernel = functools.partial(_lstm_kernel, opad=opad, hpad=hpad)

    slab = pl.pallas_call(
        kernel,
        out_shape=jax.ShapeDtypeStruct((b_pad, out_cols), jnp.float32),
        grid=(pl.cdiv(b_pad, bm),),
        in_specs=[
            pl.BlockSpec((bm, I), lambda i: (i, 0)),          # x tile
            pl.BlockSpec((bm, H), lambda i: (i, 0)),          # hidden tile
            pl.BlockSpec((bm, hpad), lambda i: (i, 0)),       # cell tile (padded)
            pl.BlockSpec((I, w_cols), lambda i: (0, 0)),      # fused Wx (resident)
            pl.BlockSpec((H, w_cols), lambda i: (0, 0)),      # fused Wh (resident)
            pl.BlockSpec((1, w_cols), lambda i: (0, 0)),      # fused bias (resident)
        ],
        out_specs=pl.BlockSpec((bm, out_cols), lambda i: (i, 0)),
        compiler_params=pltpu.CompilerParams(
            dimension_semantics=("parallel",)),
    )(x, hidden, c_pad, params["wx"], params["wh"], params["b"])

    output = slab[:B, :O]
    hidden_new = slab[:B, opad:opad + H]
    cell_new = slab[:B, opad + hpad:opad + hpad + H]
    return output, hidden_new, cell_new


def _reference(x, hidden, cell, w_i2h, b_i2h, w_i2o, b_i2o):
    combined = jnp.concatenate([x, hidden], axis=1)
    g_h = combined @ w_i2h.T + b_i2h
    g_o = combined @ w_i2o.T + b_i2o
    ig = jax.nn.sigmoid(g_o)
    og = jax.nn.sigmoid(g_o)
    c_new = ig * jnp.tanh(cell) + (1.0 - ig) * jnp.tanh(g_h)
    h_new = og * jnp.tanh(c_new)
    return g_o, h_new, c_new


if __name__ == "__main__":
    # output_size must equal hidden_size for the module's broadcasting to work.
    B, INPUT, HIDDEN, OUTPUT = 8, 16, 32, 32

    key = jax.random.PRNGKey(0)
    kx, kh, kc, kw1, kb1, kw2, kb2 = jax.random.split(key, 7)

    x = jax.random.normal(kx, (B, INPUT), dtype=jnp.float32)
    hidden = jax.random.normal(kh, (B, HIDDEN), dtype=jnp.float32)
    cell = jax.random.normal(kc, (B, HIDDEN), dtype=jnp.float32)

    # Deterministic parameter init (uniform like nn.Linear's default range).
    fan_in = INPUT + HIDDEN
    bound = 1.0 / jnp.sqrt(fan_in)
    w_i2h = jax.random.uniform(kw1, (HIDDEN, fan_in), jnp.float32, -bound, bound)
    b_i2h = jax.random.uniform(kb1, (HIDDEN,), jnp.float32, -bound, bound)
    w_i2o = jax.random.uniform(kw2, (OUTPUT, fan_in), jnp.float32, -bound, bound)
    b_i2o = jax.random.uniform(kb2, (OUTPUT,), jnp.float32, -bound, bound)

    # One-time weight prep (fused / transposed / padded / bf16) -- not per step.
    params = prepare_params(w_i2h, b_i2h, w_i2o, b_i2o, INPUT)
    jax.block_until_ready(params)

    out, h_new, c_new = lstm_forward(x, hidden, cell, params)
    jax.block_until_ready((out, h_new, c_new))

    ro, rh, rc = _reference(x, hidden, cell, w_i2h, b_i2h, w_i2o, b_i2o)
    # bf16 matmul operands (f32 accumulate) -> relaxed tolerance.
    assert jnp.allclose(out, ro, atol=3e-2, rtol=3e-2), "output mismatch"
    assert jnp.allclose(h_new, rh, atol=3e-2, rtol=3e-2), "hidden mismatch"
    assert jnp.allclose(c_new, rc, atol=3e-2, rtol=3e-2), "cell mismatch"

    print("KERNEL_OK")
</pallas_src>

<mosaic_0001>
module attributes {stable_mosaic.version = 11 : i64} {
  func.func @_lstm_kernel(%arg0: i32, %arg1: memref<8x16xf32, #tpu.memory_space<vmem>>, %arg2: memref<8x32xf32, #tpu.memory_space<vmem>>, %arg3: memref<8x128xf32, #tpu.memory_space<vmem>>, %arg4: memref<16x256xbf16, #tpu.memory_space<vmem>>, %arg5: memref<32x256xbf16, #tpu.memory_space<vmem>>, %arg6: memref<1x256xf32, #tpu.memory_space<vmem>>, %arg7: memref<8x384xf32, #tpu.memory_space<vmem>>) attributes {dimension_semantics = [#tpu.dimension_semantics<parallel>], iteration_bounds = array<i64: 1>, scalar_prefetch = 0 : i64, scratch_operands = 0 : i64, tpu.core_type = #tpu.core_type<tc>, window_params = [{transform_indices = @transform_0, window_bounds = array<i64: 8, 16>}, {transform_indices = @transform_1, window_bounds = array<i64: 8, 32>}, {transform_indices = @transform_2, window_bounds = array<i64: 8, 128>}, {pipeline_mode = #tpu.pipeline_mode<synchronous>, transform_indices = @transform_3, window_bounds = array<i64: 16, 256>}, {pipeline_mode = #tpu.pipeline_mode<synchronous>, transform_indices = @transform_4, window_bounds = array<i64: 32, 256>}, {pipeline_mode = #tpu.pipeline_mode<synchronous>, transform_indices = @transform_5, window_bounds = array<i64: 1, 256>}, {transform_indices = @transform_6, window_bounds = array<i64: 8, 384>}]} {
    %c0 = arith.constant 0 : index
    %c0_0 = arith.constant 0 : index
    %0 = vector.load %arg1[%c0, %c0_0] : memref<8x16xf32, #tpu.memory_space<vmem>>, vector<8x16xf32>
    %1 = arith.truncf %0 : vector<8x16xf32> to vector<8x16xbf16>
    %c0_1 = arith.constant 0 : index
    %c0_2 = arith.constant 0 : index
    %2 = vector.load %arg2[%c0_1, %c0_2] : memref<8x32xf32, #tpu.memory_space<vmem>>, vector<8x32xf32>
    %3 = arith.truncf %2 : vector<8x32xf32> to vector<8x32xbf16>
    %c0_3 = arith.constant 0 : index
    %c0_4 = arith.constant 0 : index
    %4 = vector.load %arg4[%c0_3, %c0_4] : memref<16x256xbf16, #tpu.memory_space<vmem>>, vector<16x256xbf16>
    %cst = arith.constant dense<0.000000e+00> : vector<8x256xf32>
    %5 = tpu.matmul %1, %4, %cst {dimension_numbers = #tpu.dot_dimension_numbers<[1], [0], [0], [1], [0, 0, 1, 1], [], []>} : vector<8x16xbf16>, vector<16x256xbf16>, vector<8x256xf32> -> vector<8x256xf32>
    %c0_5 = arith.constant 0 : index
    %c0_6 = arith.constant 0 : index
    %6 = vector.load %arg5[%c0_5, %c0_6] : memref<32x256xbf16, #tpu.memory_space<vmem>>, vector<32x256xbf16>
    %cst_7 = arith.constant dense<0.000000e+00> : vector<8x256xf32>
    %7 = tpu.matmul %3, %6, %cst_7 {dimension_numbers = #tpu.dot_dimension_numbers<[1], [0], [0], [1], [0, 0, 1, 1], [], []>} : vector<8x32xbf16>, vector<32x256xbf16>, vector<8x256xf32> -> vector<8x256xf32>
    %8 = arith.addf %5, %7 : vector<8x256xf32>
    %c0_8 = arith.constant 0 : index
    %c0_9 = arith.constant 0 : index
    %9 = vector.load %arg6[%c0_8, %c0_9] : memref<1x256xf32, #tpu.memory_space<vmem>>, vector<1x256xf32>
    %10 = vector.broadcast %9 : vector<1x256xf32> to vector<8x256xf32>
    %11 = arith.addf %8, %10 : vector<8x256xf32>
    %12 = vector.extract_strided_slice %11 {offsets = [0, 0], sizes = [8, 128], strides = [1, 1]} : vector<8x256xf32> to vector<8x128xf32>
    %13 = vector.extract_strided_slice %11 {offsets = [0, 128], sizes = [8, 128], strides = [1, 1]} : vector<8x256xf32> to vector<8x128xf32>
    %14 = arith.negf %12 : vector<8x128xf32>
    %15 = math.exp %14 : vector<8x128xf32>
    %cst_10 = arith.constant 1.000000e+00 : f32
    %16 = vector.broadcast %cst_10 : f32 to vector<8x128xf32>
    %17 = arith.addf %16, %15 : vector<8x128xf32>
    %18 = arith.divf %16, %17 : vector<8x128xf32>
    %c0_11 = arith.constant 0 : index
    %c0_12 = arith.constant 0 : index
    %19 = vector.load %arg3[%c0_11, %c0_12] : memref<8x128xf32, #tpu.memory_space<vmem>>, vector<8x128xf32>
    %20 = math.tanh %19 : vector<8x128xf32>
    %21 = arith.mulf %18, %20 : vector<8x128xf32>
    %cst_13 = arith.constant 1.000000e+00 : f32
    %22 = vector.broadcast %cst_13 : f32 to vector<8x128xf32>
    %23 = arith.subf %22, %18 : vector<8x128xf32>
    %24 = math.tanh %13 : vector<8x128xf32>
    %25 = arith.mulf %23, %24 : vector<8x128xf32>
    %26 = arith.addf %21, %25 : vector<8x128xf32>
    %27 = math.tanh %26 : vector<8x128xf32>
    %28 = arith.mulf %18, %27 : vector<8x128xf32>
    %c0_14 = arith.constant 0 : index
    %c0_15 = arith.constant 0 : index
    %29 = vector.load %arg7[%c0_14, %c0_15] : memref<8x384xf32, #tpu.memory_space<vmem>>, vector<8x128xf32>
    tpu.vector_store %arg7[%c0_14, %c0_15], %12 {strides = array<i32>} : memref<8x384xf32, #tpu.memory_space<vmem>>, vector<8x128xf32>,
    %c0_16 = arith.constant 0 : index
    %c128 = arith.constant 128 : index
    %30 = vector.load %arg7[%c0_16, %c128] : memref<8x384xf32, #tpu.memory_space<vmem>>, vector<8x128xf32>
    tpu.vector_store %arg7[%c0_16, %c128], %28 {strides = array<i32>} : memref<8x384xf32, #tpu.memory_space<vmem>>, vector<8x128xf32>,
    %c0_17 = arith.constant 0 : index
    %c256 = arith.constant 256 : index
    %31 = vector.load %arg7[%c0_17, %c256] : memref<8x384xf32, #tpu.memory_space<vmem>>, vector<8x128xf32>
    tpu.vector_store %arg7[%c0_17, %c256], %26 {strides = array<i32>} : memref<8x384xf32, #tpu.memory_space<vmem>>, vector<8x128xf32>,
    return
  }
  func.func @transform_0(%arg0: i32) -> (i32, i32) {
    %c0_i32 = arith.constant 0 : i32
    %c0_i32_0 = arith.constant 0 : i32
    return %arg0, %c0_i32 : i32, i32
  }
  func.func @transform_1(%arg0: i32) -> (i32, i32) {
    %c0_i32 = arith.constant 0 : i32
    %c0_i32_0 = arith.constant 0 : i32
    return %arg0, %c0_i32 : i32, i32
  }
  func.func @transform_2(%arg0: i32) -> (i32, i32) {
    %c0_i32 = arith.constant 0 : i32
    %c0_i32_0 = arith.constant 0 : i32
    return %arg0, %c0_i32 : i32, i32
  }
  func.func @transform_3(%arg0: i32) -> (i32, i32) {
    %c0_i32 = arith.constant 0 : i32
    %c0_i32_0 = arith.constant 0 : i32
    %c0_i32_1 = arith.constant 0 : i32
    return %c0_i32, %c0_i32_0 : i32, i32
  }
  func.func @transform_4(%arg0: i32) -> (i32, i32) {
    %c0_i32 = arith.constant 0 : i32
    %c0_i32_0 = arith.constant 0 : i32
    %c0_i32_1 = arith.constant 0 : i32
    return %c0_i32, %c0_i32_0 : i32, i32
  }
  func.func @transform_5(%arg0: i32) -> (i32, i32) {
    %c0_i32 = arith.constant 0 : i32
    %c0_i32_0 = arith.constant 0 : i32
    %c0_i32_1 = arith.constant 0 : i32
    return %c0_i32, %c0_i32_0 : i32, i32
  }
  func.func @transform_6(%arg0: i32) -> (i32, i32) {
    %c0_i32 = arith.constant 0 : i32
    %c0_i32_0 = arith.constant 0 : i32
    return %arg0, %c0_i32 : i32, i32
  }
}

</mosaic_0001>

<llo_original>
// kernel: tpu_custom_call.1
$region0: #{tpu_custom_call.1}
  #allocation0 [shape = 'u32[]', space=smem, size = 0x4, offset = 0x4, fixed_abs, tag = 'smem constant byte address 0x4 - core index']
  #allocation1 [shape = 'u32[144,128]{1,0:T(1,128)}', space=vmem, size = 0x12000, scoped, tag = 'internal scratch']
  %s0 = inlined_call_operand.hbm [shape: f32[8,16], index: 0, kind: input, shape index: {}]
  %s1 = inlined_call_operand.hbm [shape: f32[8,32], index: 1, kind: input, shape index: {}]
  %s2 = inlined_call_operand.hbm [shape: f32[8,128], index: 2, kind: input, shape index: {}]
  %s3 = inlined_call_operand.hbm [shape: bf16[16,256], index: 3, kind: input, shape index: {}]
  %s4 = inlined_call_operand.hbm [shape: bf16[32,256], index: 4, kind: input, shape index: {}]
  %s5 = inlined_call_operand.vmem [shape: f32[1,256], index: 5, kind: input, shape index: {}]
  %s6 = inlined_call_operand.hbm [shape: f32[8,384], index: 6, kind: output, shape index: {}]
  %s7 = sld [smem:[#allocation0]]
  $region54: #{tpu_custom_call.1} parent=0
    _
  %s9 = ssub.s32 1, %s7
  %s10 = scalar_select 0, %s9, %s7
  $region1: #{tpu_custom_call.1} parent=0
    #allocation2 [shape = 'u8[4096]{0}', space=vmem, size = 0x1000, scoped, tag = 'input window, operand 0, single buffered']
    #allocation3 [shape = 's32[1]{0}', space=sflag, size = 0x4, scoped, tag = 'scoped memory for tpu_custom_call.1']
    #allocation4 [shape = 's32[1]{0}', space=sflag, size = 0x4, scoped, tag = 'scoped memory for tpu_custom_call.1']
    #allocation5 [shape = 'u8[4096]{0}', space=vmem, size = 0x1000, scoped, tag = 'input window, operand 1, single buffered']
    #allocation6 [shape = 's32[1]{0}', space=sflag, size = 0x4, scoped, tag = 'scoped memory for tpu_custom_call.1']
    #allocation7 [shape = 'u8[4096]{0}', space=vmem, size = 0x1000, scoped, tag = 'input window, operand 2, single buffered']
    #allocation8 [shape = 'u8[8192]{0}', space=vmem, size = 0x2000, scoped, tag = 'input window, operand 3, single buffered']
    #allocation9 [shape = 's32[1]{0}', space=sflag, size = 0x4, scoped, tag = 'scoped memory for tpu_custom_call.1']
    #allocation10 [shape = 'u8[16384]{0}', space=vmem, size = 0x4000, scoped, tag = 'input window, operand 4, single buffered']
    #allocation11 [shape = 'u8[12288]{0}', space=vmem, size = 0x3000, scoped, tag = 'output window, operand 0, single buffered']
    %11 = vsyncpa [#allocation3], 0
    %12 = vsyncpa [#allocation6], 0
    %13 = vsyncpa [#allocation9], 0
    %14 = vsyncpa [#allocation4], 0
    // Predicated region
    $region2: #{tpu_custom_call.1} parent=1 // pred_check
      _
    $region3: #{tpu_custom_call.1} parent=1 // pred_check_branch
      %16 = sbr.rel (0) target = $region5
    $region4: #{tpu_custom_call.1} parent=1 // pred_region
      %s18 = ssub.s32 128, 128
      %19 = vsyncadd [#allocation3], %s18
      %s21 = sshll.u32 [#allocation2], 4
      %s22 = int_to_ptr.vmem [resolvable:$true] %s21
      %24 = dma.hbm_to_vmem [thread:$0]  %s0, 128, %s22, [#allocation3]
    $region5: #{tpu_custom_call.1} parent=1 // pred_fallthru
      _
    // Predicated region
    $region6: #{tpu_custom_call.1} parent=1 // pred_check
      _
    $region7: #{tpu_custom_call.1} parent=1 // pred_check_branch
      %26 = sbr.rel (0) target = $region9
    $region8: #{tpu_custom_call.1} parent=1 // pred_region
      %s28 = ssub.s32 128, 128
      %29 = vsyncadd [#allocation6], %s28
      %s31 = sshll.u32 [#allocation5], 4
      %s32 = int_to_ptr.vmem [resolvable:$true] %s31
      %34 = dma.hbm_to_vmem [thread:$0]  %s1, 128, %s32, [#allocation6]
    $region9: #{tpu_custom_call.1} parent=1 // pred_fallthru
      _
    // Predicated region
    $region10: #{tpu_custom_call.1} parent=1 // pred_check
      _
    $region11: #{tpu_custom_call.1} parent=1 // pred_check_branch
      %36 = sbr.rel (0) target = $region13
    $region12: #{tpu_custom_call.1} parent=1 // pred_region
      %s38 = ssub.s32 128, 128
      %39 = vsyncadd [#allocation6], %s38
      %s41 = sshll.u32 [#allocation7], 4
      %s42 = int_to_ptr.vmem [resolvable:$true] %s41
      %44 = dma.hbm_to_vmem [thread:$0]  %s2, 128, %s42, [#allocation6]
    $region13: #{tpu_custom_call.1} parent=1 // pred_fallthru
      _
    // Predicated region
    $region14: #{tpu_custom_call.1} parent=1 // pred_check
      _
    $region15: #{tpu_custom_call.1} parent=1 // pred_check_branch
      %46 = sbr.rel (0) target = $region17
    $region16: #{tpu_custom_call.1} parent=1 // pred_region
      %s48 = ssub.s32 256, 256
      %49 = vsyncadd [#allocation9], %s48
      %s50 = sshll.u32 [#allocation8], 4
      %s51 = int_to_ptr.vmem [resolvable:$true] %s50
      %56 = dma.hbm_to_vmem [thread:$0]  %s3, 256, %s51, [#allocation9], 128, 128, 8
    $region17: #{tpu_custom_call.1} parent=1 // pred_fallthru
      _
    // Predicated region
    $region18: #{tpu_custom_call.1} parent=1 // pred_check
      _
    $region19: #{tpu_custom_call.1} parent=1 // pred_check_branch
      %58 = sbr.rel (0) target = $region21
    $region20: #{tpu_custom_call.1} parent=1 // pred_region
      %s60 = ssub.s32 512, 512
      %61 = vsyncadd [#allocation9], %s60
      %s62 = sshll.u32 [#allocation10], 4
      %s63 = int_to_ptr.vmem [resolvable:$true] %s62
      %68 = dma.hbm_to_vmem [thread:$0]  %s4, 512, %s63, [#allocation9], 128, 128, 8
    $region21: #{tpu_custom_call.1} parent=1 // pred_fallthru
      _
    // Predicated region
    $region22: #{tpu_custom_call.1} parent=1 // pred_check
      _
    $region23: #{tpu_custom_call.1} parent=1 // pred_check_branch
      %70 = sbr.rel (0) target = $region25
    $region24: #{tpu_custom_call.1} parent=1 // pred_region
      _
    $region25: #{tpu_custom_call.1} parent=1 // pred_fallthru
      _
    // Predicated region
    $region26: #{tpu_custom_call.1} parent=1 // pred_check
      _
    $region27: #{tpu_custom_call.1} parent=1 // pred_check_branch
      %72 = sbr.rel (0) target = $region29
    $region28: #{tpu_custom_call.1} parent=1 // pred_region
      %73 = dma.done [#allocation3], 128
    $region29: #{tpu_custom_call.1} parent=1 // pred_fallthru
      _
    // Predicated region
    $region30: #{tpu_custom_call.1} parent=1 // pred_check
      _
    $region31: #{tpu_custom_call.1} parent=1 // pred_check_branch
      %75 = sbr.rel (0) target = $region33
    $region32: #{tpu_custom_call.1} parent=1 // pred_region
      %76 = dma.done [#allocation6], 128
    $region33: #{tpu_custom_call.1} parent=1 // pred_fallthru
      _
    // Predicated region
    $region34: #{tpu_custom_call.1} parent=1 // pred_check
      _
    $region35: #{tpu_custom_call.1} parent=1 // pred_check_branch
      %78 = sbr.rel (0) target = $region37
    $region36: #{tpu_custom_call.1} parent=1 // pred_region
      %79 = dma.done [#allocation6], 128
    $region37: #{tpu_custom_call.1} parent=1 // pred_fallthru
      _
    // Predicated region
    $region38: #{tpu_custom_call.1} parent=1 // pred_check
      _
    $region39: #{tpu_custom_call.1} parent=1 // pred_check_branch
      %81 = sbr.rel (0) target = $region41
    $region40: #{tpu_custom_call.1} parent=1 // pred_region
      %82 = dma.done [#allocation9], 256
    $region41: #{tpu_custom_call.1} parent=1 // pred_fallthru
      _
    // Predicated region
    $region42: #{tpu_custom_call.1} parent=1 // pred_check
      _
    $region43: #{tpu_custom_call.1} parent=1 // pred_check_branch
      %84 = sbr.rel (0) target = $region45
    $region44: #{tpu_custom_call.1} parent=1 // pred_region
      %85 = dma.done [#allocation9], 512
    $region45: #{tpu_custom_call.1} parent=1 // pred_fallthru
      _
    %v87 = vld [vmem:[#allocation2] sm:$0xff]
    %v88 = vpack.c.bf16 %v87, %v87
    %v89 = vld [vmem:[#allocation5] sm:$0xff]
    %v90 = vpack.c.bf16 %v89, %v89
    %v91 = vld [vmem:[#allocation8] sm:$0xff]
    %v92 = vld [vmem:[#allocation8 + $0x8] sm:$0xff]
    %v93 = vld [vmem:[#allocation10] sm:$0xff]
    %v94 = vld [vmem:[#allocation10 + $0x8] sm:$0xff]
    %v95 = vld [vmem:[#allocation10 + $0x10] sm:$0xff]
    %v96 = vld [vmem:[#allocation10 + $0x18] sm:$0xff]
    %v101 = vunpack.c.l.b16 %v93
    %v102 = vunpack.c.h.b16 %v93
    %v103 = vunpack.c.l.b16 %v94
    %v104 = vunpack.c.h.b16 %v94
    %v105 = vunpack.c.l.b16 %v95
    %v106 = vunpack.c.h.b16 %v95
    %v107 = vunpack.c.l.b16 %v96
    %v108 = vunpack.c.h.b16 %v96
    %v109 = vpack.c.b16 %v103, %v101
    %v110 = vpack.c.b16 %v104, %v102
    %v111 = vpack.c.b16 %v107, %v105
    %v112 = vpack.c.b16 %v108, %v106
    %vm117 = vcmask 261120
    %v119 = vsel %vm117, %v90, 0
    %121 = vmatprep.subr.bf16.mxu0 %v110
    %122 = vmatpush1.bf16.msra.mxu0 %v109
    %123 = vmatprep.subr.bf16.mxu0 %v112
    %124 = vmatpush1.bf16.msra.mxu0 %v111
    %125 = vmatprep.subr.bf16.mxu0 0
    %126 = vmatpush1.bf16.msra.mxu0 0
    %127 = vmatprep.subr.bf16.mxu0 0
    %128 = vmatpush1.bf16.msra.mxu0 0
    %129 = vmatprep.subr.bf16.mxu0 0
    %130 = vmatpush1.bf16.msra.mxu0 0
    %131 = vmatprep.subr.bf16.mxu0 0
    %132 = vmatpush1.bf16.msra.mxu0 0
    %133 = vmatprep.subr.bf16.mxu0 0
    %134 = vmatpush1.bf16.msra.mxu0 0
    %135 = vmatprep.subr.bf16.mxu0 0
    %136 = vmatpush1.bf16.msra.mxu0 0
    %137 = vmatprep.subr.bf16.mxu0 0
    %138 = vmatpush1.bf16.msra.mxu0 0
    %139 = vmatprep.subr.bf16.mxu0 0
    %140 = vmatpush1.bf16.msra.mxu0 0
    %141 = vmatprep.subr.bf16.mxu0 0
    %142 = vmatpush1.bf16.msra.mxu0 0
    %143 = vmatprep.subr.bf16.mxu0 0
    %144 = vmatpush1.bf16.msra.mxu0 0
    %145 = vmatprep.subr.bf16.mxu0 0
    %146 = vmatpush1.bf16.msra.mxu0 0
    %147 = vmatprep.subr.bf16.mxu0 0
    %148 = vmatpush1.bf16.msra.mxu0 0
    %149 = vmatprep.subr.bf16.mxu0 0
    %150 = vmatpush1.bf16.msra.mxu0 0
    %151 = vmatprep.subr.bf16.mxu0 0
    %152 = vmatpush1.bf16.msra.mxu0 0
    %153 = vmatprep.mubr.bf16.mxu0 0
    %154 = vmatmul.mubr.bf16.gmra.mrb[0].mxu0 %v119
    %v155 = vpop.f32.mrb[0].mxu0
    %v156 = vadd.f32 0.0, %v155
    %v157 = vpop.f32.mrb[0].mxu0
    %v158 = vadd.f32 0.0, %v157
    %v159 = vpop.f32.mrb[0].mxu0
    %v160 = vpop.f32.mrb[0].mxu0
    %161 = vdwg.mxu0
    %v164 = vunpack.c.l.b16 %v91
    %v165 = vunpack.c.h.b16 %v91
    %v166 = vunpack.c.l.b16 %v92
    %v167 = vunpack.c.h.b16 %v92
    %v168 = vpack.c.b16 %v166, %v164
    %v169 = vpack.c.b16 %v167, %v165
    %vm172 = vcmask 130048
    %v174 = vsel %vm172, %v88, 0
    %176 = vmatprep.subr.bf16.mxu0 %v169
    %177 = vmatpush1.bf16.msra.mxu0 %v168
    %178 = vmatprep.subr.bf16.mxu0 0
    %179 = vmatpush1.bf16.msra.mxu0 0
    %180 = vmatprep.subr.bf16.mxu0 0
    %181 = vmatpush1.bf16.msra.mxu0 0
    %182 = vmatprep.subr.bf16.mxu0 0
    %183 = vmatpush1.bf16.msra.mxu0 0
    %184 = vmatprep.subr.bf16.mxu0 0
    %185 = vmatpush1.bf16.msra.mxu0 0
    %186 = vmatprep.subr.bf16.mxu0 0
    %187 = vmatpush1.bf16.msra.mxu0 0
    %188 = vmatprep.subr.bf16.mxu0 0
    %189 = vmatpush1.bf16.msra.mxu0 0
    %190 = vmatprep.subr.bf16.mxu0 0
    %191 = vmatpush1.bf16.msra.mxu0 0
    %192 = vmatprep.subr.bf16.mxu0 0
    %193 = vmatpush1.bf16.msra.mxu0 0
    %194 = vmatprep.subr.bf16.mxu0 0
    %195 = vmatpush1.bf16.msra.mxu0 0
    %196 = vmatprep.subr.bf16.mxu0 0
    %197 = vmatpush1.bf16.msra.mxu0 0
    %198 = vmatprep.subr.bf16.mxu0 0
    %199 = vmatpush1.bf16.msra.mxu0 0
    %200 = vmatprep.subr.bf16.mxu0 0
    %201 = vmatpush1.bf16.msra.mxu0 0
    %202 = vmatprep.subr.bf16.mxu0 0
    %203 = vmatpush1.bf16.msra.mxu0 0
    %204 = vmatprep.subr.bf16.mxu0 0
    %205 = vmatpush1.bf16.msra.mxu0 0
    %206 = vmatprep.subr.bf16.mxu0 0
    %207 = vmatpush1.bf16.msra.mxu0 0
    %208 = vmatprep.mubr.bf16.mxu0 0
    %209 = vmatmul.mubr.bf16.gmra.mrb[0].mxu0 %v174
    %v210 = vpop.f32.mrb[0].mxu0
    %v211 = vadd.f32 %v156, %v210
    %v212 = vpop.f32.mrb[0].mxu0
    %v213 = vadd.f32 %v158, %v212
    %v214 = vpop.f32.mrb[0].mxu0
    %v215 = vpop.f32.mrb[0].mxu0
    %216 = vdwg.mxu0
    %v217 = vld [vmem:[%s5] sm:$0x3]
    %v219 = vlaneseq
    %v220 = vshrl.u32 %v219, 7
    %v221 = vsub.s32 0, %v220
    %v222 = vrot.slane %v217, %v221
    %v223 = vlaneseq
    %v224 = vshrl.u32 %v223, 7
    %v225 = vsub.s32 1, %v224
    %v226 = vrot.slane %v217, %v225
    %v229 = vadd.f32 %v211, %v222
    %v230 = vadd.f32 %v213, %v226
    %v231 = vxor.u32 %v229, 2147483648
    %v232 = vmul.f32 %v231, 1.442695
    %v233 = vpow.pop %v232
    %v234 = vadd.f32 %v233, 1.0
    %v235 = vrcp.pop %v234
    %v236 = vmul.f32 1.0, %v235
    %v237 = vld [vmem:[#allocation7] sm:$0xff]
    %v238 = vtanh.pop %v237
    %v239 = vmul.f32 %v236, %v238
    %v240 = vsub.f32 1.0, %v236
    %v241 = vtanh.pop %v230
    %v242 = vmul.f32 %v240, %v241
    %v243 = vadd.f32 %v239, %v242
    %v244 = vtanh.pop %v243
    %v245 = vmul.f32 %v236, %v244
    %246 = vst [vmem:[#allocation11] sm:$0xff] %v229
    %247 = vst [vmem:[#allocation11 + $0x8] sm:$0xff] %v245
    %248 = vst [vmem:[#allocation11 + $0x10] sm:$0xff] %v243
    // Predicated region
    $region46: #{tpu_custom_call.1} parent=1 // pred_check
      _
    $region47: #{tpu_custom_call.1} parent=1 // pred_check_branch
      %250 = sbr.rel (0) target = $region49
    $region48: #{tpu_custom_call.1} parent=1 // pred_region
      %s252 = ssub.s32 384, 384
      %253 = vsyncadd [#allocation4], %s252
      %s255 = sshll.u32 [#allocation11], 4
      %s256 = int_to_ptr.vmem [resolvable:$true] %s255
      %258 = dma.vmem_to_hbm [thread:$0]  %s256, 384, %s6, [#allocation4]
    $region49: #{tpu_custom_call.1} parent=1 // pred_fallthru
      _
    // Predicated region
    $region50: #{tpu_custom_call.1} parent=1 // pred_check
      _
    $region51: #{tpu_custom_call.1} parent=1 // pred_check_branch
      %260 = sbr.rel (0) target = $region53
    $region52: #{tpu_custom_call.1} parent=1 // pred_region
      %261 = dma.done [#allocation4], 384
    $region53: #{tpu_custom_call.1} parent=1 // pred_fallthru
      _
    %262 = vsyncpa [#allocation3], 1
    %263 = vsyncpa [#allocation6], 1
    %264 = vsyncpa [#allocation9], 1
    %265 = vsyncpa [#allocation4], 1

</llo_original>
